<compile_context>
chip_gen: v5e
topology: v5e:2x2
jax: 0.10.0
libtpu: 0.0.40
codegen_flags: <defaults>
</compile_context>

<pallas_src>
from functools import partial

import numpy as np
import jax
import jax.numpy as jnp
from jax import lax
from jax.experimental import pallas as pl
from jax.experimental.pallas import tpu as pltpu

_LANE = 128


def _full_spec(shape):
    # single-program grid: whole array is one VMEM block
    return pl.BlockSpec(shape, lambda i: (0,) * len(shape))


# ----------------------------------------------------------------------------
# Fused kernel: encoder -> similarity -> logits (-> discriminator if use_d)
# ----------------------------------------------------------------------------
def _fused_disccon_kernel(*refs, batch, use_d):
    if use_d:
        (x_ref, we_ref, be_ref,
         w1_ref, b1_ref, w2_ref, b2_ref, w3_ref, b3_ref, w4_ref, b4_ref,
         logits_ref, d_ref) = refs
    else:
        x_ref, we_ref, be_ref, logits_ref = refs

    n = 2 * batch

    # ---- encoder stand-in: linear projection + row-wise L2 normalization ----
    # TODO(synk): ResNet_SSL encoder source is unavailable; this deterministic
    # linear projection reproduces only the output shape/normalization contract.
    z = jnp.dot(x_ref[...], we_ref[...].astype(jnp.float32),
                preferred_element_type=jnp.float32) + be_ref[...]
    z = z * lax.rsqrt(jnp.sum(z * z, axis=-1, keepdims=True) + 1e-12)
    feat = z.shape[-1]
    z1 = z[:batch, :]
    z2 = z[batch:, :]

    # ---- similarity: contract the shared feature (lane) axis directly ----
    sim = lax.dot_general(z, z, dimension_numbers=(((1,), (1,)), ((), ())),
                          preferred_element_type=jnp.float32)          # (2B, 2B)

    # ---- positives: pos[i] = <z[i], z[(i+B) % 2B]>  (O(n*D), no (n,n) masks) ----
    z_swap = jnp.concatenate([z2, z1], axis=0)                         # (2B, D)
    pos = jnp.sum(z * z_swap, axis=-1, keepdims=True)                  # (2B, 1)

    # ---- negatives: row i drops columns {a, a+B} (a = i % B), order kept.
    #      3 static lane-shifted slices + 2 selects (no gather). ----
    s0 = sim[:, 0:n - 2]
    s1 = sim[:, 1:n - 1]
    s2 = sim[:, 2:n]
    a = lax.broadcasted_iota(jnp.int32, (n, n - 2), 0) % batch
    k = lax.broadcasted_iota(jnp.int32, (n, n - 2), 1)
    neg = jnp.where(k < a, s0, jnp.where(k < a + batch - 1, s1, s2))   # (2B, 2B-2)

    # ---- lane-dense padded logits slab: col 0 = pos, cols 1..2B-2 = neg ----
    # Placement uses a tiny constant 0/1 matmul (exact) so the kernel issues a
    # single full-width unmasked store.
    kk = lax.broadcasted_iota(jnp.int32, (n - 2, _LANE), 0)
    jj = lax.broadcasted_iota(jnp.int32, (n - 2, _LANE), 1)
    place = (jj == kk + 1).astype(jnp.float32)                         # (2B-2, 128)
    cols = lax.broadcasted_iota(jnp.int32, (n, _LANE), 1)
    logits_ref[...] = (jnp.dot(neg, place, preferred_element_type=jnp.float32)
                       + pos * (cols == 0).astype(jnp.float32))

    if not use_d:
        return

    # ---- hardest negative: first-occurrence argmax over sim[:B, B:] with the
    #      positive-pair diagonal zeroed (matches the torch reference), turned
    #      into a one-hot row-gather of z2 via a tiny MXU matmul. ----
    sim_q = sim[:batch, batch:]                                        # (B, B)
    r = lax.broadcasted_iota(jnp.int32, (batch, batch), 0)
    c = lax.broadcasted_iota(jnp.int32, (batch, batch), 1)
    masked = jnp.where(r == c, 0.0, sim_q)
    m = jnp.max(masked, axis=1, keepdims=True)
    idx = jnp.min(jnp.where(masked == m, c, jnp.int32(n)),
                  axis=1, keepdims=True)                               # (B, 1)
    onehot = (c == idx).astype(jnp.float32)                            # (B, B)
    z2_hard = jnp.dot(onehot, z2, preferred_element_type=jnp.float32)  # (B, D)

    # ---- discriminator MLP on [pos pairs ; hardest-neg pairs]  (2B rows) ----
    # First layer is split over the two halves, so no lane-axis concatenation
    # is needed:  [zl | zr] @ W1 == zl @ W1[:D] + zr @ W1[D:]
    z_left = jnp.concatenate([z1, z1], axis=0)                         # (2B, D)
    z_right = jnp.concatenate([z2, z2_hard], axis=0)                   # (2B, D)

    def lrelu(h):
        return jnp.where(h > 0, h, 0.2 * h)

    w1f = w1_ref[...].astype(jnp.float32)
    h = lrelu(jnp.dot(z_left, w1f[:feat, :], preferred_element_type=jnp.float32)
              + jnp.dot(z_right, w1f[feat:, :], preferred_element_type=jnp.float32)
              + b1_ref[...])
    h = lrelu(jnp.dot(h, w2_ref[...].astype(jnp.float32),
                      preferred_element_type=jnp.float32) + b2_ref[...])
    h = lrelu(jnp.dot(h, w3_ref[...].astype(jnp.float32),
                      preferred_element_type=jnp.float32) + b3_ref[...])
    # Final Linear(512, 1): VPU multiply + lane reduction instead of a width-1
    # MXU matmul / masked store.
    d = jnp.sum(h * w4_ref[...], axis=-1, keepdims=True) + b4_ref[...]  # (2B, 1)
    d_ref[...] = d * (cols == 0).astype(jnp.float32)


# ----------------------------------------------------------------------------
# DiscCon.forward
# ----------------------------------------------------------------------------
def disccon_forward(view_1, view_2, w_enc, b_enc, disc_params, use_D=False):
    B = view_1.shape[0]
    n = 2 * B
    assert n - 1 <= _LANE, "logits row must fit in one 128-lane slab"
    x = jnp.concatenate([view_1.reshape(B, -1), view_2.reshape(B, -1)], axis=0)
    labels = jnp.zeros((n,), dtype=jnp.int32)
    cp = pltpu.CompilerParams(dimension_semantics=("arbitrary",))
    # TODO(synk): at production shapes (real encoder / large batch) tile rows/K
    # with BlockSpec index_maps and add a parallel grid axis (v7x 2nd TC)
    # instead of single full-array blocks.

    if not use_D:
        args = (x, w_enc, b_enc)
        logits_pad = pl.pallas_call(
            partial(_fused_disccon_kernel, batch=B, use_d=False),
            out_shape=jax.ShapeDtypeStruct((n, _LANE), jnp.float32),
            grid=(1,),
            in_specs=[_full_spec(a.shape) for a in args],
            out_specs=_full_spec((n, _LANE)),
            compiler_params=cp,
        )(*args)
        return logits_pad[:, :n - 1], labels

    w1, b1, w2, b2, w3, b3, w4, b4 = disc_params
    w4_row = jnp.asarray(w4, jnp.float32).reshape(1, -1)   # (1, 512): lane layout
    args = (x, w_enc, b_enc, w1, b1, w2, b2, w3, b3, w4_row, b4)
    logits_pad, d_pad = pl.pallas_call(
        partial(_fused_disccon_kernel, batch=B, use_d=True),
        out_shape=(jax.ShapeDtypeStruct((n, _LANE), jnp.float32),
                   jax.ShapeDtypeStruct((n, _LANE), jnp.float32)),
        grid=(1,),
        in_specs=[_full_spec(a.shape) for a in args],
        out_specs=(_full_spec((n, _LANE)), _full_spec((n, _LANE))),
        compiler_params=cp,
    )(*args)
    logits = logits_pad[:, :n - 1]
    d_out = d_pad[:, :1]
    return logits, labels, (d_out[:B], d_out[B:])


# ----------------------------------------------------------------------------
# Pure-JAX / numpy reference (same synthetic encoder, same bf16-rounded weights)
# ----------------------------------------------------------------------------
def _ref_forward(view_1, view_2, w_enc, b_enc, disc_params):
    B = view_1.shape[0]
    n = 2 * B
    f32 = lambda t: jnp.asarray(t, jnp.float32)
    x = jnp.concatenate([view_1.reshape(B, -1), view_2.reshape(B, -1)], axis=0)
    z = x @ f32(w_enc) + b_enc
    z = z * lax.rsqrt(jnp.sum(z * z, axis=-1, keepdims=True) + 1e-12)
    z1, z2 = z[:B], z[B:]
    sim = np.asarray(z @ z.T)
    pos = np.concatenate([np.diagonal(sim, B), np.diagonal(sim, -B)]).reshape(n, 1)
    mask = np.logical_not(np.eye(n) + np.eye(n, k=B) + np.eye(n, k=-B)).astype(bool)
    neg = sim[mask].reshape(n, -1)
    logits = np.concatenate([pos, neg], axis=1)
    hardest = np.argmax(sim[:B, B:] * (1.0 - np.eye(B)), axis=1)
    w1, b1, w2, b2, w3, b3, w4, b4 = disc_params

    def lrelu(h):
        return jnp.where(h > 0, h, 0.2 * h)

    def mlp(v):
        h = lrelu(v @ f32(w1) + b1)
        h = lrelu(h @ f32(w2) + b2)
        h = lrelu(h @ f32(w3) + b3)
        return h @ f32(w4) + b4

    d_in_pos = jnp.concatenate([z1, z2], axis=1)
    d_in_neg = jnp.concatenate([z1, z2[hardest]], axis=1)
    return logits, mlp(d_in_pos), mlp(d_in_neg)


if __name__ == "__main__":
    B, C, H, W_img = 8, 3, 16, 16
    D = 32        # ssl_feature_dim
    HID = 512     # discriminator hidden width

    key = jax.random.PRNGKey(0)
    ks = jax.random.split(key, 8)
    view_1 = jax.random.normal(ks[0], (B, C, H, W_img), jnp.float32)
    view_2 = jax.random.normal(ks[1], (B, C, H, W_img), jnp.float32)

    F_in = C * H * W_img
    # Large weights stored in bf16 (halves HBM->VMEM bytes); math stays f32 —
    # both kernel and reference use the same bf16-rounded values.
    w_enc = (jax.random.normal(ks[2], (F_in, D), jnp.float32)
             / jnp.sqrt(F_in)).astype(jnp.bfloat16)
    b_enc = jnp.zeros((1, D), jnp.float32)

    def linear_init(kk, fan_in, fan_out, weight_dtype=jnp.float32):
        lim = 1.0 / float(np.sqrt(fan_in))
        kw, kb = jax.random.split(kk)
        w = jax.random.uniform(kw, (fan_in, fan_out), jnp.float32, -lim, lim)
        bias = jax.random.uniform(kb, (1, fan_out), jnp.float32, -lim, lim)
        return w.astype(weight_dtype), bias

    w1, b1 = linear_init(ks[3], 2 * D, HID, jnp.bfloat16)
    w2, b2 = linear_init(ks[4], HID, HID, jnp.bfloat16)
    w3, b3 = linear_init(ks[5], HID, HID, jnp.bfloat16)
    w4, b4 = linear_init(ks[6], HID, 1, jnp.float32)
    disc_params = (w1, b1, w2, b2, w3, b3, w4, b4)

    # use_D=False path
    logits0, labels0 = disccon_forward(
        view_1, view_2, w_enc, b_enc, disc_params, use_D=False)
    # use_D=True path
    logits, labels, (d_pos, d_neg) = disccon_forward(
        view_1, view_2, w_enc, b_enc, disc_params, use_D=True)
    jax.block_until_ready((logits0, labels0, logits, labels, d_pos, d_neg))

    assert logits0.shape == (2 * B, 2 * B - 1)
    assert logits.shape == (2 * B, 2 * B - 1)
    assert labels.shape == (2 * B,)
    assert d_pos.shape == (B, 1) and d_neg.shape == (B, 1)

    ref_logits, ref_d_pos, ref_d_neg = _ref_forward(
        view_1, view_2, w_enc, b_enc, disc_params)
    np.testing.assert_allclose(np.asarray(logits0), np.asarray(ref_logits),
                               rtol=2e-3, atol=2e-3)
    np.testing.assert_allclose(np.asarray(logits), np.asarray(ref_logits),
                               rtol=2e-3, atol=2e-3)
    np.testing.assert_allclose(np.asarray(d_pos), np.asarray(ref_d_pos),
                               rtol=2e-3, atol=2e-3)
    np.testing.assert_allclose(np.asarray(d_neg), np.asarray(ref_d_neg),
                               rtol=2e-3, atol=2e-3)
    assert np.all(np.asarray(labels) == 0)
    assert np.all(np.asarray(labels0) == 0)

    print("KERNEL_OK")
</pallas_src>

<mosaic_0001>
module attributes {stable_mosaic.version = 11 : i64} {
  func.func @_fused_disccon_kernel(%arg0: i32, %arg1: memref<16x768xf32, #tpu.memory_space<vmem>>, %arg2: memref<768x32xbf16, #tpu.memory_space<vmem>>, %arg3: memref<1x32xf32, #tpu.memory_space<vmem>>, %arg4: memref<16x128xf32, #tpu.memory_space<vmem>>) attributes {dimension_semantics = [#tpu.dimension_semantics<arbitrary>], iteration_bounds = array<i64: 1>, scalar_prefetch = 0 : i64, scratch_operands = 0 : i64, tpu.core_type = #tpu.core_type<tc>, window_params = [{pipeline_mode = #tpu.pipeline_mode<synchronous>, transform_indices = @transform_0, window_bounds = array<i64: 16, 768>}, {pipeline_mode = #tpu.pipeline_mode<synchronous>, transform_indices = @transform_1, window_bounds = array<i64: 768, 32>}, {pipeline_mode = #tpu.pipeline_mode<synchronous>, transform_indices = @transform_2, window_bounds = array<i64: 1, 32>}, {pipeline_mode = #tpu.pipeline_mode<synchronous>, transform_indices = @transform_3, window_bounds = array<i64: 16, 128>}]} {
    %c0 = arith.constant 0 : index
    %c0_0 = arith.constant 0 : index
    %0 = vector.load %arg1[%c0, %c0_0] : memref<16x768xf32, #tpu.memory_space<vmem>>, vector<16x768xf32>
    %c0_1 = arith.constant 0 : index
    %c0_2 = arith.constant 0 : index
    %1 = vector.load %arg2[%c0_1, %c0_2] : memref<768x32xbf16, #tpu.memory_space<vmem>>, vector<768x32xbf16>
    %2 = arith.extf %1 : vector<768x32xbf16> to vector<768x32xf32>
    %cst = arith.constant dense<0.000000e+00> : vector<16x32xf32>
    %3 = tpu.matmul %0, %2, %cst {dimension_numbers = #tpu.dot_dimension_numbers<[1], [0], [0], [1], [0, 0, 1, 1], [], []>} : vector<16x768xf32>, vector<768x32xf32>, vector<16x32xf32> -> vector<16x32xf32>
    %c0_3 = arith.constant 0 : index
    %c0_4 = arith.constant 0 : index
    %4 = vector.load %arg3[%c0_3, %c0_4] : memref<1x32xf32, #tpu.memory_space<vmem>>, vector<1x32xf32>
    %5 = vector.broadcast %4 : vector<1x32xf32> to vector<16x32xf32>
    %6 = arith.addf %3, %5 : vector<16x32xf32>
    %7 = arith.mulf %6, %6 : vector<16x32xf32>
    %cst_5 = arith.constant dense<0.000000e+00> : vector<16xf32>
    %8 = vector.multi_reduction <add>, %7, %cst_5 [1] : vector<16x32xf32> to vector<16xf32>
    %9 = vector.shape_cast %8 : vector<16xf32> to vector<16x1xf32>
    %cst_6 = arith.constant 9.99999996E-13 : f32
    %10 = vector.broadcast %cst_6 : f32 to vector<16x1xf32>
    %11 = arith.addf %9, %10 : vector<16x1xf32>
    %12 = math.rsqrt %11 : vector<16x1xf32>
    %13 = vector.broadcast %12 : vector<16x1xf32> to vector<16x32xf32>
    %14 = arith.mulf %6, %13 : vector<16x32xf32>
    %15 = vector.extract_strided_slice %14 {offsets = [0, 0], sizes = [8, 32], strides = [1, 1]} : vector<16x32xf32> to vector<8x32xf32>
    %16 = vector.extract_strided_slice %14 {offsets = [8, 0], sizes = [8, 32], strides = [1, 1]} : vector<16x32xf32> to vector<8x32xf32>
    %cst_7 = arith.constant dense<0.000000e+00> : vector<16x16xf32>
    %17 = tpu.matmul %14, %14, %cst_7 {dimension_numbers = #tpu.dot_dimension_numbers<[1], [1], [0], [0], [0, 0, 1, 0], [], []>} : vector<16x32xf32>, vector<16x32xf32>, vector<16x16xf32> -> vector<16x16xf32>
    %18 = tpu.concatenate %16, %15 in 0 : vector<8x32xf32>, vector<8x32xf32> -> vector<16x32xf32>
    %19 = arith.mulf %14, %18 : vector<16x32xf32>
    %cst_8 = arith.constant dense<0.000000e+00> : vector<16xf32>
    %20 = vector.multi_reduction <add>, %19, %cst_8 [1] : vector<16x32xf32> to vector<16xf32>
    %21 = vector.shape_cast %20 : vector<16xf32> to vector<16x1xf32>
    %22 = vector.extract_strided_slice %17 {offsets = [0, 0], sizes = [16, 14], strides = [1, 1]} : vector<16x16xf32> to vector<16x14xf32>
    %23 = vector.extract_strided_slice %17 {offsets = [0, 1], sizes = [16, 14], strides = [1, 1]} : vector<16x16xf32> to vector<16x14xf32>
    %24 = vector.extract_strided_slice %17 {offsets = [0, 2], sizes = [16, 14], strides = [1, 1]} : vector<16x16xf32> to vector<16x14xf32>
    %25 = tpu.iota {dimensions = array<i32: 0>} : vector<16x14xi32>
    %c8_i32 = arith.constant 8 : i32
    %c0_i32 = arith.constant 0 : i32
    %26 = arith.cmpi eq, %c8_i32, %c0_i32 : i32
    %c1_i32 = arith.constant 1 : i32
    %27 = arith.select %26, %c1_i32, %c8_i32 : i32
    %28 = vector.broadcast %27 : i32 to vector<16x14xi32>
    %29 = arith.remsi %25, %28 : vector<16x14xi32>
    %c0_i32_9 = arith.constant 0 : i32
    %30 = vector.broadcast %c0_i32_9 : i32 to vector<16x14xi32>
    %31 = arith.cmpi ne, %29, %30 : vector<16x14xi32>
    %c0_i32_10 = arith.constant 0 : i32
    %32 = vector.broadcast %c0_i32_10 : i32 to vector<16x14xi32>
    %33 = arith.cmpi slt, %29, %32 : vector<16x14xi32>
    %c0_i32_11 = arith.constant 0 : i32
    %34 = arith.cmpi slt, %27, %c0_i32_11 : i32
    %35 = vector.broadcast %34 : i1 to vector<16x14xi1>
    %36 = vector.broadcast %35 : vector<16x14xi1> to vector<16x14xi1>
    %37 = arith.xori %33, %36 : vector<16x14xi1>
    %38 = arith.andi %37, %31 : vector<16x14xi1>
    %39 = vector.broadcast %27 : i32 to vector<16x14xi32>
    %40 = arith.addi %29, %39 : vector<16x14xi32>
    %41 = arith.select %38, %40, %29 : vector<16x14xi1>, vector<16x14xi32>
    %42 = tpu.iota {dimensions = array<i32: 1>} : vector<16x14xi32>
    %43 = arith.cmpi slt, %42, %41 : vector<16x14xi32>
    %c8_i32_12 = arith.constant 8 : i32
    %44 = vector.broadcast %c8_i32_12 : i32 to vector<16x14xi32>
    %45 = arith.addi %41, %44 : vector<16x14xi32>
    %c1_i32_13 = arith.constant 1 : i32
    %46 = vector.broadcast %c1_i32_13 : i32 to vector<16x14xi32>
    %47 = arith.subi %45, %46 : vector<16x14xi32>
    %48 = arith.cmpi slt, %42, %47 : vector<16x14xi32>
    %49 = arith.select %48, %23, %24 : vector<16x14xi1>, vector<16x14xf32>
    %50 = arith.select %43, %22, %49 : vector<16x14xi1>, vector<16x14xf32>
    %51 = tpu.iota {dimensions = array<i32: 0>} : vector<14x128xi32>
    %52 = tpu.iota {dimensions = array<i32: 1>} : vector<14x128xi32>
    %c1_i32_14 = arith.constant 1 : i32
    %53 = vector.broadcast %c1_i32_14 : i32 to vector<14x128xi32>
    %54 = arith.addi %51, %53 : vector<14x128xi32>
    %55 = arith.cmpi eq, %52, %54 : vector<14x128xi32>
    %56 = arith.extui %55 : vector<14x128xi1> to vector<14x128xi32>
    %57 = arith.sitofp %56 : vector<14x128xi32> to vector<14x128xf32>
    %58 = tpu.iota {dimensions = array<i32: 1>} : vector<16x128xi32>
    %cst_15 = arith.constant dense<0.000000e+00> : vector<16x128xf32>
    %59 = tpu.matmul %50, %57, %cst_15 {dimension_numbers = #tpu.dot_dimension_numbers<[1], [0], [0], [1], [0, 0, 1, 1], [], []>} : vector<16x14xf32>, vector<14x128xf32>, vector<16x128xf32> -> vector<16x128xf32>
    %c0_i32_16 = arith.constant 0 : i32
    %60 = vector.broadcast %c0_i32_16 : i32 to vector<16x128xi32>
    %61 = arith.cmpi eq, %58, %60 : vector<16x128xi32>
    %62 = arith.extui %61 : vector<16x128xi1> to vector<16x128xi32>
    %63 = arith.sitofp %62 : vector<16x128xi32> to vector<16x128xf32>
    %64 = vector.broadcast %21 : vector<16x1xf32> to vector<16x128xf32>
    %65 = arith.mulf %64, %63 : vector<16x128xf32>
    %66 = arith.addf %59, %65 : vector<16x128xf32>
    %c0_17 = arith.constant 0 : index
    %c0_18 = arith.constant 0 : index
    %67 = vector.load %arg4[%c0_17, %c0_18] : memref<16x128xf32, #tpu.memory_space<vmem>>, vector<16x128xf32>
    tpu.vector_store %arg4[%c0_17, %c0_18], %66 {strides = array<i32>} : memref<16x128xf32, #tpu.memory_space<vmem>>, vector<16x128xf32>,
    return
  }
  func.func @transform_0(%arg0: i32) -> (i32, i32) {
    %c0_i32 = arith.constant 0 : i32
    %c0_i32_0 = arith.constant 0 : i32
    %c0_i32_1 = arith.constant 0 : i32
    return %c0_i32, %c0_i32_0 : i32, i32
  }
  func.func @transform_1(%arg0: i32) -> (i32, i32) {
    %c0_i32 = arith.constant 0 : i32
    %c0_i32_0 = arith.constant 0 : i32
    %c0_i32_1 = arith.constant 0 : i32
    return %c0_i32, %c0_i32_0 : i32, i32
  }
  func.func @transform_2(%arg0: i32) -> (i32, i32) {
    %c0_i32 = arith.constant 0 : i32
    %c0_i32_0 = arith.constant 0 : i32
    %c0_i32_1 = arith.constant 0 : i32
    return %c0_i32, %c0_i32_0 : i32, i32
  }
  func.func @transform_3(%arg0: i32) -> (i32, i32) {
    %c0_i32 = arith.constant 0 : i32
    %c0_i32_0 = arith.constant 0 : i32
    %c0_i32_1 = arith.constant 0 : i32
    return %c0_i32, %c0_i32_0 : i32, i32
  }
}

</mosaic_0001>

<llo_original>
// kernel: tpu_custom_call.1
$region0: #{tpu_custom_call.1}
  #allocation0 [shape = 'u32[]', space=smem, size = 0x4, offset = 0x4, fixed_abs, tag = 'smem constant byte address 0x4 - core index']
  #allocation1 [shape = 'u32[72,128]{1,0:T(1,128)}', space=vmem, size = 0x9000, scoped, tag = 'internal scratch']
  %s0 = inlined_call_operand.vmem [shape: f32[16,768], index: 0, kind: input, shape index: {}]
  %s1 = inlined_call_operand.vmem [shape: bf16[768,32], index: 1, kind: input, shape index: {}]
  %s2 = inlined_call_operand.vmem [shape: f32[1,32], index: 2, kind: input, shape index: {}]
  %s3 = inlined_call_operand.hbm [shape: f32[16,128], index: 3, kind: output, shape index: {}]
  %s4 = sld [smem:[#allocation0]]
  $region22: #{tpu_custom_call.1} parent=0
    _
  %s6 = ssub.s32 1, %s4
  %s7 = scalar_select 0, %s6, %s4
  $region1: #{tpu_custom_call.1} parent=0
    #allocation2 [shape = 'u8[8192]{0}', space=vmem, size = 0x2000, scoped, tag = 'output window, operand 0, single buffered']
    #allocation3 [shape = 's32[1]{0}', space=sflag, size = 0x4, scoped, tag = 'scoped memory for tpu_custom_call.1']
    %8 = vsyncpa [#allocation3], 0
    // Predicated region
    $region2: #{tpu_custom_call.1} parent=1 // pred_check
      _
    $region3: #{tpu_custom_call.1} parent=1 // pred_check_branch
      %10 = sbr.rel (0) target = $region5
    $region4: #{tpu_custom_call.1} parent=1 // pred_region
      _
    $region5: #{tpu_custom_call.1} parent=1 // pred_fallthru
      _
    // Predicated region
    $region6: #{tpu_custom_call.1} parent=1 // pred_check
      _
    $region7: #{tpu_custom_call.1} parent=1 // pred_check_branch
      %12 = sbr.rel (0) target = $region9
    $region8: #{tpu_custom_call.1} parent=1 // pred_region
      _
    $region9: #{tpu_custom_call.1} parent=1 // pred_fallthru
      _
    // Predicated region
    $region10: #{tpu_custom_call.1} parent=1 // pred_check
      _
    $region11: #{tpu_custom_call.1} parent=1 // pred_check_branch
      %14 = sbr.rel (0) target = $region13
    $region12: #{tpu_custom_call.1} parent=1 // pred_region
      _
    $region13: #{tpu_custom_call.1} parent=1 // pred_fallthru
      _
    %v15 = vld [vmem:[%s0] sm:$0xff]
    %v16 = vld [vmem:[%s0 + $0x8] sm:$0xff]
    %v17 = vld [vmem:[%s0 + $0x10] sm:$0xff]
    %v18 = vld [vmem:[%s0 + $0x18] sm:$0xff]
    %v19 = vld [vmem:[%s0 + $0x20] sm:$0xff]
    %v20 = vld [vmem:[%s0 + $0x28] sm:$0xff]
    %v21 = vld [vmem:[%s0 + $0x30] sm:$0xff]
    %v22 = vld [vmem:[%s0 + $0x38] sm:$0xff]
    %v23 = vld [vmem:[%s0 + $0x40] sm:$0xff]
    %v24 = vld [vmem:[%s0 + $0x48] sm:$0xff]
    %v25 = vld [vmem:[%s0 + $0x50] sm:$0xff]
    %v26 = vld [vmem:[%s0 + $0x58] sm:$0xff]
    %v27 = vld [vmem:[%s1] sm:$0xf]
    %v28 = vld [vmem:[%s1 + $0x4] sm:$0xf]
    %v29 = vld [vmem:[%s1 + $0x8] sm:$0xf]
    %v30 = vld [vmem:[%s1 + $0xc] sm:$0xf]
    %v31 = vld [vmem:[%s1 + $0x10] sm:$0xf]
    %v32 = vld [vmem:[%s1 + $0x14] sm:$0xf]
    %v33 = vld [vmem:[%s1 + $0x18] sm:$0xf]
    %v34 = vld [vmem:[%s1 + $0x1c] sm:$0xf]
    %v35 = vld [vmem:[%s1 + $0x20] sm:$0xf]
    %v36 = vld [vmem:[%s1 + $0x24] sm:$0xf]
    %v37 = vld [vmem:[%s1 + $0x28] sm:$0xf]
    %v38 = vld [vmem:[%s1 + $0x2c] sm:$0xf]
    %v39 = vld [vmem:[%s1 + $0x30] sm:$0xf]
    %v40 = vld [vmem:[%s1 + $0x34] sm:$0xf]
    %v41 = vld [vmem:[%s1 + $0x38] sm:$0xf]
    %v42 = vld [vmem:[%s1 + $0x3c] sm:$0xf]
    %v43 = vld [vmem:[%s1 + $0x40] sm:$0xf]
    %v44 = vld [vmem:[%s1 + $0x44] sm:$0xf]
    %v45 = vld [vmem:[%s1 + $0x48] sm:$0xf]
    %v46 = vld [vmem:[%s1 + $0x4c] sm:$0xf]
    %v47 = vld [vmem:[%s1 + $0x50] sm:$0xf]
    %v48 = vld [vmem:[%s1 + $0x54] sm:$0xf]
    %v49 = vld [vmem:[%s1 + $0x58] sm:$0xf]
    %v50 = vld [vmem:[%s1 + $0x5c] sm:$0xf]
    %v51 = vld [vmem:[%s1 + $0x60] sm:$0xf]
    %v52 = vld [vmem:[%s1 + $0x64] sm:$0xf]
    %v53 = vld [vmem:[%s1 + $0x68] sm:$0xf]
    %v54 = vld [vmem:[%s1 + $0x6c] sm:$0xf]
    %v55 = vld [vmem:[%s1 + $0x70] sm:$0xf]
    %v56 = vld [vmem:[%s1 + $0x74] sm:$0xf]
    %v57 = vld [vmem:[%s1 + $0x78] sm:$0xf]
    %v58 = vld [vmem:[%s1 + $0x7c] sm:$0xf]
    %v59 = vld [vmem:[%s1 + $0x80] sm:$0xf]
    %v60 = vld [vmem:[%s1 + $0x84] sm:$0xf]
    %v61 = vld [vmem:[%s1 + $0x88] sm:$0xf]
    %v62 = vld [vmem:[%s1 + $0x8c] sm:$0xf]
    %v63 = vld [vmem:[%s1 + $0x90] sm:$0xf]
    %v64 = vld [vmem:[%s1 + $0x94] sm:$0xf]
    %v65 = vld [vmem:[%s1 + $0x98] sm:$0xf]
    %v66 = vld [vmem:[%s1 + $0x9c] sm:$0xf]
    %v67 = vld [vmem:[%s1 + $0xa0] sm:$0xf]
    %v68 = vld [vmem:[%s1 + $0xa4] sm:$0xf]
    %v69 = vld [vmem:[%s1 + $0xa8] sm:$0xf]
    %v70 = vld [vmem:[%s1 + $0xac] sm:$0xf]
    %v71 = vld [vmem:[%s1 + $0xb0] sm:$0xf]
    %v72 = vld [vmem:[%s1 + $0xb4] sm:$0xf]
    %v73 = vld [vmem:[%s1 + $0xb8] sm:$0xf]
    %v74 = vld [vmem:[%s1 + $0xbc] sm:$0xf]
    %v75 = vld [vmem:[%s1 + $0xc0] sm:$0xf]
    %v76 = vld [vmem:[%s1 + $0xc4] sm:$0xf]
    %v77 = vld [vmem:[%s1 + $0xc8] sm:$0xf]
    %v78 = vld [vmem:[%s1 + $0xcc] sm:$0xf]
    %v79 = vld [vmem:[%s1 + $0xd0] sm:$0xf]
    %v80 = vld [vmem:[%s1 + $0xd4] sm:$0xf]
    %v81 = vld [vmem:[%s1 + $0xd8] sm:$0xf]
    %v82 = vld [vmem:[%s1 + $0xdc] sm:$0xf]
    %v83 = vld [vmem:[%s1 + $0xe0] sm:$0xf]
    %v84 = vld [vmem:[%s1 + $0xe4] sm:$0xf]
    %v85 = vld [vmem:[%s1 + $0xe8] sm:$0xf]
    %v86 = vld [vmem:[%s1 + $0xec] sm:$0xf]
    %v87 = vld [vmem:[%s1 + $0xf0] sm:$0xf]
    %v88 = vld [vmem:[%s1 + $0xf4] sm:$0xf]
    %v89 = vld [vmem:[%s1 + $0xf8] sm:$0xf]
    %v90 = vld [vmem:[%s1 + $0xfc] sm:$0xf]
    %v91 = vld [vmem:[%s1 + $0x100] sm:$0xf]
    %v92 = vld [vmem:[%s1 + $0x104] sm:$0xf]
    %v93 = vld [vmem:[%s1 + $0x108] sm:$0xf]
    %v94 = vld [vmem:[%s1 + $0x10c] sm:$0xf]
    %v95 = vld [vmem:[%s1 + $0x110] sm:$0xf]
    %v96 = vld [vmem:[%s1 + $0x114] sm:$0xf]
    %v97 = vld [vmem:[%s1 + $0x118] sm:$0xf]
    %v98 = vld [vmem:[%s1 + $0x11c] sm:$0xf]
    %v99 = vld [vmem:[%s1 + $0x120] sm:$0xf]
    %v100 = vld [vmem:[%s1 + $0x124] sm:$0xf]
    %v101 = vld [vmem:[%s1 + $0x128] sm:$0xf]
    %v102 = vld [vmem:[%s1 + $0x12c] sm:$0xf]
    %v103 = vld [vmem:[%s1 + $0x130] sm:$0xf]
    %v104 = vld [vmem:[%s1 + $0x134] sm:$0xf]
    %v105 = vld [vmem:[%s1 + $0x138] sm:$0xf]
    %v106 = vld [vmem:[%s1 + $0x13c] sm:$0xf]
    %v107 = vld [vmem:[%s1 + $0x140] sm:$0xf]
    %v108 = vld [vmem:[%s1 + $0x144] sm:$0xf]
    %v109 = vld [vmem:[%s1 + $0x148] sm:$0xf]
    %v110 = vld [vmem:[%s1 + $0x14c] sm:$0xf]
    %v111 = vld [vmem:[%s1 + $0x150] sm:$0xf]
    %v112 = vld [vmem:[%s1 + $0x154] sm:$0xf]
    %v113 = vld [vmem:[%s1 + $0x158] sm:$0xf]
    %v114 = vld [vmem:[%s1 + $0x15c] sm:$0xf]
    %v115 = vld [vmem:[%s1 + $0x160] sm:$0xf]
    %v116 = vld [vmem:[%s1 + $0x164] sm:$0xf]
    %v117 = vld [vmem:[%s1 + $0x168] sm:$0xf]
    %v118 = vld [vmem:[%s1 + $0x16c] sm:$0xf]
    %v119 = vld [vmem:[%s1 + $0x170] sm:$0xf]
    %v120 = vld [vmem:[%s1 + $0x174] sm:$0xf]
    %v121 = vld [vmem:[%s1 + $0x178] sm:$0xf]
    %v122 = vld [vmem:[%s1 + $0x17c] sm:$0xf]
    %v123 = vunpack.c.l.bf16 %v27
    %v124 = vunpack.c.l.bf16 %v28
    %v125 = vunpack.c.l.bf16 %v29
    %v126 = vunpack.c.l.bf16 %v30
    %v127 = vunpack.c.l.bf16 %v31
    %v128 = vunpack.c.l.bf16 %v32
    %v129 = vunpack.c.l.bf16 %v33
    %v130 = vunpack.c.l.bf16 %v34
    %v131 = vunpack.c.l.bf16 %v35
    %v132 = vunpack.c.l.bf16 %v36
    %v133 = vunpack.c.l.bf16 %v37
    %v134 = vunpack.c.l.bf16 %v38
    %v135 = vunpack.c.l.bf16 %v39
    %v136 = vunpack.c.l.bf16 %v40
    %v137 = vunpack.c.l.bf16 %v41
    %v138 = vunpack.c.l.bf16 %v42
    %v139 = vunpack.c.l.bf16 %v43
    %v140 = vunpack.c.l.bf16 %v44
    %v141 = vunpack.c.l.bf16 %v45
    %v142 = vunpack.c.l.bf16 %v46
    %v143 = vunpack.c.l.bf16 %v47
    %v144 = vunpack.c.l.bf16 %v48
    %v145 = vunpack.c.l.bf16 %v49
    %v146 = vunpack.c.l.bf16 %v50
    %v147 = vunpack.c.l.bf16 %v51
    %v148 = vunpack.c.l.bf16 %v52
    %v149 = vunpack.c.l.bf16 %v53
    %v150 = vunpack.c.l.bf16 %v54
    %v151 = vunpack.c.l.bf16 %v55
    %v152 = vunpack.c.l.bf16 %v56
    %v153 = vunpack.c.l.bf16 %v57
    %v154 = vunpack.c.l.bf16 %v58
    %v155 = vunpack.c.l.bf16 %v59
    %v156 = vunpack.c.l.bf16 %v60
    %v157 = vunpack.c.l.bf16 %v61
    %v158 = vunpack.c.l.bf16 %v62
    %v159 = vunpack.c.l.bf16 %v63
    %v160 = vunpack.c.l.bf16 %v64
    %v161 = vunpack.c.l.bf16 %v65
    %v162 = vunpack.c.l.bf16 %v66
    %v163 = vunpack.c.l.bf16 %v67
    %v164 = vunpack.c.l.bf16 %v68
    %v165 = vunpack.c.l.bf16 %v69
    %v166 = vunpack.c.l.bf16 %v70
    %v167 = vunpack.c.l.bf16 %v71
    %v168 = vunpack.c.l.bf16 %v72
    %v169 = vunpack.c.l.bf16 %v73
    %v170 = vunpack.c.l.bf16 %v74
    %v171 = vunpack.c.l.bf16 %v75
    %v172 = vunpack.c.l.bf16 %v76
    %v173 = vunpack.c.l.bf16 %v77
    %v174 = vunpack.c.l.bf16 %v78
    %v175 = vunpack.c.l.bf16 %v79
    %v176 = vunpack.c.l.bf16 %v80
    %v177 = vunpack.c.l.bf16 %v81
    %v178 = vunpack.c.l.bf16 %v82
    %v179 = vunpack.c.l.bf16 %v83
    %v180 = vunpack.c.l.bf16 %v84
    %v181 = vunpack.c.l.bf16 %v85
    %v182 = vunpack.c.l.bf16 %v86
    %v183 = vunpack.c.l.bf16 %v87
    %v184 = vunpack.c.l.bf16 %v88
    %v185 = vunpack.c.l.bf16 %v89
    %v186 = vunpack.c.l.bf16 %v90
    %v187 = vunpack.c.l.bf16 %v91
    %v188 = vunpack.c.l.bf16 %v92
    %v189 = vunpack.c.l.bf16 %v93
    %v190 = vunpack.c.l.bf16 %v94
    %v191 = vunpack.c.l.bf16 %v95
    %v192 = vunpack.c.l.bf16 %v96
    %v193 = vunpack.c.l.bf16 %v97
    %v194 = vunpack.c.l.bf16 %v98
    %v195 = vunpack.c.l.bf16 %v99
    %v196 = vunpack.c.l.bf16 %v100
    %v197 = vunpack.c.l.bf16 %v101
    %v198 = vunpack.c.l.bf16 %v102
    %v199 = vunpack.c.l.bf16 %v103
    %v200 = vunpack.c.l.bf16 %v104
    %v201 = vunpack.c.l.bf16 %v105
    %v202 = vunpack.c.l.bf16 %v106
    %v203 = vunpack.c.l.bf16 %v107
    %v204 = vunpack.c.l.bf16 %v108
    %v205 = vunpack.c.l.bf16 %v109
    %v206 = vunpack.c.l.bf16 %v110
    %v207 = vunpack.c.l.bf16 %v111
    %v208 = vunpack.c.l.bf16 %v112
    %v209 = vunpack.c.l.bf16 %v113
    %v210 = vunpack.c.l.bf16 %v114
    %v211 = vunpack.c.l.bf16 %v115
    %v212 = vunpack.c.l.bf16 %v116
    %v213 = vunpack.c.l.bf16 %v117
    %v214 = vunpack.c.l.bf16 %v118
    %v215 = vunpack.c.l.bf16 %v119
    %v216 = vunpack.c.l.bf16 %v120
    %v217 = vunpack.c.l.bf16 %v121
    %v218 = vunpack.c.l.bf16 %v122
    %v219 = vld [vmem:[%s2] sm:$0x1]
    %v221 = vperm.slane %v219, 0
    %223 = vmatpush.msra.mxu0 %v138
    %224 = vmatpush.msra.mxu0 %v137
    %225 = vmatpush.msra.mxu0 %v136
    %226 = vmatpush.msra.mxu0 %v135
    %227 = vmatpush.msra.mxu0 %v134
    %228 = vmatpush.msra.mxu0 %v133
    %229 = vmatpush.msra.mxu0 %v132
    %230 = vmatpush.msra.mxu0 %v131
    %231 = vmatpush.msra.mxu0 %v130
    %232 = vmatpush.msra.mxu0 %v129
    %233 = vmatpush.msra.mxu0 %v128
    %234 = vmatpush.msra.mxu0 %v127
    %235 = vmatpush.msra.mxu0 %v126
    %236 = vmatpush.msra.mxu0 %v125
    %237 = vmatpush.msra.mxu0 %v124
    %238 = vmatpush.msra.mxu0 %v123
    %239 = vmatmul.f32.gmra.mxu0 %v15
    %v240 = vpop.f32.mrf.mxu0
    %v241 = vadd.f32 %v221, %v240
    %242 = vmatmul.f32.gmra.mxu0 %v21
    %v243 = vpop.f32.mrf.mxu0
    %v244 = vadd.f32 %v221, %v243
    %245 = vdwg.mxu0
    %246 = vmatpush.msra.mxu0 %v154
    %247 = vmatpush.msra.mxu0 %v153
    %248 = vmatpush.msra.mxu0 %v152
    %249 = vmatpush.msra.mxu0 %v151
    %250 = vmatpush.msra.mxu0 %v150
    %251 = vmatpush.msra.mxu0 %v149
    %252 = vmatpush.msra.mxu0 %v148
    %253 = vmatpush.msra.mxu0 %v147
    %254 = vmatpush.msra.mxu0 %v146
    %255 = vmatpush.msra.mxu0 %v145
    %256 = vmatpush.msra.mxu0 %v144
    %257 = vmatpush.msra.mxu0 %v143
    %258 = vmatpush.msra.mxu0 %v142
    %259 = vmatpush.msra.mxu0 %v141
    %260 = vmatpush.msra.mxu0 %v140
    %261 = vmatpush.msra.mxu0 %v139
    %262 = vmatmul.f32.gmra.mxu0 %v16
    %v263 = vpop.f32.mrf.mxu0
    %v264 = vadd.f32 %v241, %v263
    %265 = vmatmul.f32.gmra.mxu0 %v22
    %v266 = vpop.f32.mrf.mxu0
    %v267 = vadd.f32 %v244, %v266
    %268 = vdwg.mxu0
    %269 = vmatpush.msra.mxu0 %v170
    %270 = vmatpush.msra.mxu0 %v169
    %271 = vmatpush.msra.mxu0 %v168
    %272 = vmatpush.msra.mxu0 %v167
    %273 = vmatpush.msra.mxu0 %v166
    %274 = vmatpush.msra.mxu0 %v165
    %275 = vmatpush.msra.mxu0 %v164
    %276 = vmatpush.msra.mxu0 %v163
    %277 = vmatpush.msra.mxu0 %v162
    %278 = vmatpush.msra.mxu0 %v161
    %279 = vmatpush.msra.mxu0 %v160
    %280 = vmatpush.msra.mxu0 %v159
    %281 = vmatpush.msra.mxu0 %v158
    %282 = vmatpush.msra.mxu0 %v157
    %283 = vmatpush.msra.mxu0 %v156
    %284 = vmatpush.msra.mxu0 %v155
    %285 = vmatmul.f32.gmra.mxu0 %v17
    %v286 = vpop.f32.mrf.mxu0
    %v287 = vadd.f32 %v264, %v286
    %288 = vmatmul.f32.gmra.mxu0 %v23
    %v289 = vpop.f32.mrf.mxu0
    %v290 = vadd.f32 %v267, %v289
    %291 = vdwg.mxu0
    %292 = vmatpush.msra.mxu0 %v186
    %293 = vmatpush.msra.mxu0 %v185
    %294 = vmatpush.msra.mxu0 %v184
    %295 = vmatpush.msra.mxu0 %v183
    %296 = vmatpush.msra.mxu0 %v182
    %297 = vmatpush.msra.mxu0 %v181
    %298 = vmatpush.msra.mxu0 %v180
    %299 = vmatpush.msra.mxu0 %v179
    %300 = vmatpush.msra.mxu0 %v178
    %301 = vmatpush.msra.mxu0 %v177
    %302 = vmatpush.msra.mxu0 %v176
    %303 = vmatpush.msra.mxu0 %v175
    %304 = vmatpush.msra.mxu0 %v174
    %305 = vmatpush.msra.mxu0 %v173
    %306 = vmatpush.msra.mxu0 %v172
    %307 = vmatpush.msra.mxu0 %v171
    %308 = vmatmul.f32.gmra.mxu0 %v18
    %v309 = vpop.f32.mrf.mxu0
    %v310 = vadd.f32 %v287, %v309
    %311 = vmatmul.f32.gmra.mxu0 %v24
    %v312 = vpop.f32.mrf.mxu0
    %v313 = vadd.f32 %v290, %v312
    %314 = vdwg.mxu0
    %315 = vmatpush.msra.mxu0 %v202
    %316 = vmatpush.msra.mxu0 %v201
    %317 = vmatpush.msra.mxu0 %v200
    %318 = vmatpush.msra.mxu0 %v199
    %319 = vmatpush.msra.mxu0 %v198
    %320 = vmatpush.msra.mxu0 %v197
    %321 = vmatpush.msra.mxu0 %v196
    %322 = vmatpush.msra.mxu0 %v195
    %323 = vmatpush.msra.mxu0 %v194
    %324 = vmatpush.msra.mxu0 %v193
    %325 = vmatpush.msra.mxu0 %v192
    %326 = vmatpush.msra.mxu0 %v191
    %327 = vmatpush.msra.mxu0 %v190
    %328 = vmatpush.msra.mxu0 %v189
    %329 = vmatpush.msra.mxu0 %v188
    %330 = vmatpush.msra.mxu0 %v187
    %331 = vmatmul.f32.gmra.mxu0 %v19
    %v332 = vpop.f32.mrf.mxu0
    %v333 = vadd.f32 %v310, %v332
    %334 = vmatmul.f32.gmra.mxu0 %v25
    %v335 = vpop.f32.mrf.mxu0
    %v336 = vadd.f32 %v313, %v335
    %337 = vdwg.mxu0
    %338 = vmatpush.msra.mxu0 %v218
    %339 = vmatpush.msra.mxu0 %v217
    %340 = vmatpush.msra.mxu0 %v216
    %341 = vmatpush.msra.mxu0 %v215
    %342 = vmatpush.msra.mxu0 %v214
    %343 = vmatpush.msra.mxu0 %v213
    %344 = vmatpush.msra.mxu0 %v212
    %345 = vmatpush.msra.mxu0 %v211
    %346 = vmatpush.msra.mxu0 %v210
    %347 = vmatpush.msra.mxu0 %v209
    %348 = vmatpush.msra.mxu0 %v208
    %349 = vmatpush.msra.mxu0 %v207
    %350 = vmatpush.msra.mxu0 %v206
    %351 = vmatpush.msra.mxu0 %v205
    %352 = vmatpush.msra.mxu0 %v204
    %353 = vmatpush.msra.mxu0 %v203
    %354 = vmatmul.f32.gmra.mxu0 %v20
    %v355 = vpop.f32.mrf.mxu0
    %v356 = vadd.f32 %v333, %v355
    %357 = vmatmul.f32.gmra.mxu0 %v26
    %v358 = vpop.f32.mrf.mxu0
    %v359 = vadd.f32 %v336, %v358
    %360 = vdwg.mxu0
    %v361 = vmul.f32 %v356, %v356
    %v362 = vmul.f32 %v359, %v359
    %vm363 = vcmask 261120
    %v364 = vsel %vm363, %v361, 0.0
    %365 = vadd.xlane.f32.xlu0 %v364
    %v366 = vpop.xlane.xlu0 %365
    %v367 = vsel %vm363, %v362, 0.0
    %368 = vadd.xlane.f32.xlu0 %v367
    %v369 = vpop.xlane.xlu0 %368
    %v370 = vadd.f32 %v366, 1e-12
    %v371 = vadd.f32 %v369, 1e-12
    %v372 = vrsqrt.pop %v370
    %v373 = vmul.f32 %v372, %v370
    %v374 = vmul.f32 %v373, %v372
    %v375 = vmul.f32 0.5, %v374
    %v376 = vsub.f32 1.5, %v375
    %v377 = vmul.f32 %v372, %v376
    %vm378 = vweird.f32 %v370
    %vm379 = vweird.f32 %v372
    %vm380 = vmor %vm378, %vm379
    %v381 = vsel %vm380, %v372, %v377
    %v382 = vrsqrt.pop %v371
    %v383 = vmul.f32 %v382, %v371
    %v384 = vmul.f32 %v383, %v382
    %v385 = vmul.f32 0.5, %v384
    %v386 = vsub.f32 1.5, %v385
    %v387 = vmul.f32 %v382, %v386
    %vm388 = vweird.f32 %v371
    %vm389 = vweird.f32 %v382
    %vm390 = vmor %vm388, %vm389
    %v391 = vsel %vm390, %v382, %v387
    %v392 = vmul.f32 %v356, %v381
    %v393 = vmul.f32 %v359, %v391
    %v395 = vsel %vm363, %v392, 0
    %v398 = vsel %vm363, %v393, 0
    %400 = vmatpush.xpose.msra.mxu0 0.0
    %401 = vmatpush.xpose.msra.mxu0 0.0
    %402 = vmatpush.xpose.msra.mxu0 0.0
    %403 = vmatpush.xpose.msra.mxu0 0.0
    %404 = vmatpush.xpose.msra.mxu0 0.0
    %405 = vmatpush.xpose.msra.mxu0 0.0
    %406 = vmatpush.xpose.msra.mxu0 0.0
    %407 = vmatpush.xpose.msra.mxu0 0.0
    %408 = vmatpush.xpose.msra.mxu0 0.0
    %409 = vmatpush.xpose.msra.mxu0 0.0
    %410 = vmatpush.xpose.msra.mxu0 0.0
    %411 = vmatpush.xpose.msra.mxu0 0.0
    %412 = vmatpush.xpose.msra.mxu0 0.0
    %413 = vmatpush.xpose.msra.mxu0 0.0
    %414 = vmatpush.xpose.msra.mxu0 %v398
    %415 = vmatpush.xpose.msra.mxu0 %v395
    %416 = vmatmul.f32.gmra.mxu0 %v395
    %v417 = vpop.f32.mrf.mxu0
    %v418 = vadd.f32 0.0, %v417
    %419 = vmatmul.f32.gmra.mxu0 %v398
    %v420 = vpop.f32.mrf.mxu0
    %v421 = vadd.f32 0.0, %v420
    %422 = vdwg.mxu0
    %v423 = vmul.f32 %v392, %v393
    %v424 = vsel %vm363, %v423, 0.0
    %425 = vadd.xlane.f32.xlu0 %v424
    %v426 = vpop.xlane.xlu0 %425
    %v427 = vlaneseq
    %v428 = vshrl.u32 %v427, 7
    %v429 = vadd.s32 %v428, 8
    %vm430 = vcmp.lt.s32.totalorder %v428, 0
    %v431 = vsub.s32 0, %v428
    %v432 = vsel %vm430, %v431, %v428
    %v433 = vshrl.u32 %v432, 3
    %v434 = vand.u32 %v432, 7
    %v435 = vsub.s32 0, %v434
    %v436 = vsel %vm430, %v435, %v434
    %vm437 = vcmp.lt.s32.totalorder %v429, 0
    %v438 = vsub.s32 0, %v429
    %v439 = vsel %vm437, %v438, %v429
    %v440 = vshrl.u32 %v439, 3
    %v441 = vand.u32 %v439, 7
    %v442 = vsub.s32 0, %v441
    %v443 = vsel %vm437, %v442, %v441
    %vm444 = vcmp.ne.s32.totalorder %v436, 0
    %vm445 = vcmp.ne.s32.totalorder %v443, 0
    %vm446 = vcmp.lt.s32.totalorder %v436, 0
    %vm447 = vcmp.lt.s32.totalorder %v443, 0
    %vm448 = vmand %vm446, %vm444
    %vm449 = vmand %vm447, %vm445
    %v450 = vadd.s32 %v436, 8
    %v451 = vadd.s32 %v443, 8
    %v452 = vsel %vm448, %v450, %v436
    %v453 = vsel %vm449, %v451, %v443
    %v454 = vlaneseq
    %v455 = vand.u32 %v454, 127
    %vm456 = vcmp.lt.s32.totalorder %v455, %v452
    %vm457 = vcmp.lt.s32.totalorder %v455, %v453
    %v458 = vadd.s32 %v452, 8
    %v459 = vadd.s32 %v453, 8
    %v460 = vsub.s32 %v458, 1
    %v461 = vsub.s32 %v459, 1
    %vm462 = vcmp.lt.s32.totalorder %v455, %v460
    %vm463 = vcmp.lt.s32.totalorder %v455, %v461
    %466 = vrot.lane.b32.xlu0 %v418, 127
    %v467 = vpop.permute.xlu0 %466
    %468 = vrot.lane.b32.xlu0 %v421, 127
    %v469 = vpop.permute.xlu0 %468
    %472 = vrot.lane.b32.xlu0 %v418, 126
    %v473 = vpop.permute.xlu0 %472
    %474 = vrot.lane.b32.xlu0 %v421, 126
    %v475 = vpop.permute.xlu0 %474
    %v478 = vsel %vm462, %v467, %v473
    %v479 = vsel %vm463, %v469, %v475
    %v480 = vsel %vm456, %v418, %v478
    %v481 = vsel %vm457, %v421, %v479
    %v482 = vadd.s32 %v428, 1
    %v483 = vadd.s32 %v429, 1
    %vm484 = vcmp.eq.s32.totalorder %v455, %v482
    %vm485 = vcmp.eq.s32.totalorder %v455, %v483
    %v486 = vsel %vm484, 1, 0
    %v487 = vsel %vm485, 1, 0
    %v488 = vcvt.s32.f32 %v486
    %v489 = vcvt.s32.f32 %v487
    %vm490 = vcmp.eq.s32.totalorder %v455, 0
    %v491 = vsel %vm490, 1, 0
    %v492 = vcvt.s32.f32 %v491
    %v493 = vmul.f32 %v426, %v492
    %vm494 = vcmask 113664
    %v496 = vsel %vm494, %v480, 0
    %v499 = vsel %vm494, %v481, 0
    %vm501 = vcmask 1045504
    %v503 = vsel %vm501, %v489, 0
    %505 = vmatpush.msra.mxu0 0.0
    %506 = vmatpush.msra.mxu0 0.0
    %507 = vmatpush.msra.mxu0 0.0
    %508 = vmatpush.msra.mxu0 0.0
    %509 = vmatpush.msra.mxu0 0.0
    %510 = vmatpush.msra.mxu0 0.0
    %511 = vmatpush.msra.mxu0 0.0
    %512 = vmatpush.msra.mxu0 0.0
    %513 = vmatpush.msra.mxu0 0.0
    %514 = vmatpush.msra.mxu0 0.0
    %515 = vmatpush.msra.mxu0 0.0
    %516 = vmatpush.msra.mxu0 0.0
    %517 = vmatpush.msra.mxu0 0.0
    %518 = vmatpush.msra.mxu0 0.0
    %519 = vmatpush.msra.mxu0 %v503
    %520 = vmatpush.msra.mxu0 %v488
    %521 = vmatmul.f32.gmra.mxu0 %v496
    %v522 = vpop.f32.mrf.mxu0
    %v523 = vadd.f32 %v493, %v522
    %524 = vmatmul.f32.gmra.mxu0 %v499
    %v525 = vpop.f32.mrf.mxu0
    %v526 = vadd.f32 %v493, %v525
    %527 = vdwg.mxu0
    %528 = vst [vmem:[#allocation2] sm:$0xff] %v523
    %529 = vst [vmem:[#allocation2 + $0x8] sm:$0xff] %v526
    // Predicated region
    $region14: #{tpu_custom_call.1} parent=1 // pred_check
      _
    $region15: #{tpu_custom_call.1} parent=1 // pred_check_branch
      %531 = sbr.rel (0) target = $region17
    $region16: #{tpu_custom_call.1} parent=1 // pred_region
      %533 = vsyncadd [#allocation3], 0
      %s534 = sshll.u32 [#allocation2], 4
      %s535 = int_to_ptr.vmem [resolvable:$true] %s534
      %s536 = sshll.u32 %s3, 4
      %s537 = int_to_ptr.hbm [resolvable:$true] %s536
      %542 = dma.vmem_to_hbm [thread:$0]  %s535, 256, %s537, [#allocation3], 128, 128, 8
    $region17: #{tpu_custom_call.1} parent=1 // pred_fallthru
      _
    // Predicated region
    $region18: #{tpu_custom_call.1} parent=1 // pred_check
      _
    $region19: #{tpu_custom_call.1} parent=1 // pred_check_branch
      %544 = sbr.rel (0) target = $region21
    $region20: #{tpu_custom_call.1} parent=1 // pred_region
      %546 = dma.done [#allocation3], 256
    $region21: #{tpu_custom_call.1} parent=1 // pred_fallthru
      _
    %547 = vsyncpa [#allocation3], 1

</llo_original>
